<compile_context>
chip_gen: v6e
topology: v6e:2x2x1
jax: 0.10.0
libtpu: 0.0.40
codegen_flags: <defaults>
</compile_context>

<pallas_src>
import functools

import jax
import jax.numpy as jnp
from jax import lax
from jax.experimental import pallas as pl
from jax.experimental.pallas import tpu as pltpu

_EPS = 1e-8
_MEAN = (0.485, 0.456, 0.406)
_STD = (0.229, 0.224, 0.225)


def _make_kernel(C):
    def kernel(*refs):
        params_ref = refs[0]                 # (4*C,) f32 in SMEM
        p_refs = refs[1:1 + C]               # C pred channel planes (bn, bhw)
        t_refs = refs[1 + C:1 + 2 * C]       # C true channel planes (bn, bhw)
        o_ref = refs[1 + 2 * C]              # (8, 128) partial-sum slab

        dot = pn2 = tn2 = None
        for c in range(C):                   # C == 3, fully unrolled VPU FMAs
            pc = (p_refs[c][...].astype(jnp.float32) * params_ref[c]
                  + params_ref[C + c])
            tc = (t_refs[c][...].astype(jnp.float32) * params_ref[2 * C + c]
                  + params_ref[3 * C + c])
            d, pp, tt = pc * tc, pc * pc, tc * tc
            dot = d if dot is None else dot + d
            pn2 = pp if pn2 is None else pn2 + pp
            tn2 = tt if tn2 is None else tn2 + tt
        # dot / max(||p||*||t||, eps) == dot * rsqrt(max(||p||^2*||t||^2, eps^2))
        cos = dot * lax.rsqrt(jnp.maximum(pn2 * tn2, _EPS * _EPS))
        # One scalar partial per grid cell, splatted over a lane-dense (8,128)
        # slab: unmasked vst, rule-compliant block.  Wrapper reads slab[0, 0].
        o_ref[...] = jnp.broadcast_to(jnp.sum(cos), o_ref.shape)

    return kernel


@functools.partial(jax.jit, static_argnames=("mean", "std", "max_tile_bytes"))
def normalize_cos_similarity(y_pred, y_true, mean=_MEAN, std=_STD,
                             max_tile_bytes=None):
    """y_pred, y_true: NCHW float arrays. Returns scalar float32 mean cosine."""
    y_pred = jnp.asarray(y_pred)
    y_true = jnp.asarray(y_true)
    N, C, H, W = y_pred.shape
    assert y_true.shape == y_pred.shape
    assert C == len(mean) == len(std) == 3
    HW = H * W

    mean_a = jnp.asarray(mean, jnp.float32)
    std_a = jnp.asarray(std, jnp.float32)

    def fold(x):
        # Single fused range pass over x: any value outside [0, 1] => denorm.
        # Folded into per-channel (scale, bias) so the kernel stays a tiled,
        # unconditional per-plane FMA.
        oob = jnp.any(jnp.logical_or(x < 0.0, x > 1.0))
        scale = jnp.where(oob, std_a, jnp.ones_like(std_a))
        bias = jnp.where(oob, mean_a, jnp.zeros_like(mean_a))
        return scale, bias

    scale_p, bias_p = fold(y_pred)
    scale_t, bias_t = fold(y_true)
    # TODO(synk): the PyTorch post-denorm range re-check only prints; no data effect.
    # TODO(synk): on v5e/v6e this range pass could be fused into the main kernel
    # (per-tile min/max + 4 oob-variant partials); kept as a separate fused
    # reduction so v7x (near VALU-bound at 3.2 TB/s) is not regressed.

    # ---- layout: no HBM transpose -------------------------------------------
    pad_path = (HW % 128) != 0
    if pad_path:
        # Odd spatial extent: de-normalize in the wrapper (fuses with the pad
        # copy), zero-pad HW to a lane multiple so padded pixels give cos == 0,
        # and hand identity scale/bias to the kernel.
        HW_pad = pl.cdiv(HW, 512) * 512

        def prep(x, scale, bias):
            x = x.astype(jnp.float32).reshape(N, C, HW)
            x = x * scale.reshape(1, C, 1) + bias.reshape(1, C, 1)
            x = jnp.pad(x, ((0, 0), (0, 0), (0, HW_pad - HW)))
            return x.reshape(N, C * HW_pad)

        p2d = prep(y_pred, scale_p, bias_p)
        t2d = prep(y_true, scale_t, bias_t)
        unit = jnp.ones((C,), jnp.float32)
        zero = jnp.zeros((C,), jnp.float32)
        params = jnp.concatenate([unit, zero, unit, zero])
    else:
        # Free, contiguous reshape NCHW -> (N, C*HW); the per-channel view is
        # expressed purely through BlockSpec index maps (no materialized copy).
        HW_pad = HW
        p2d = y_pred.reshape(N, C * HW)
        t2d = y_true.reshape(N, C * HW)
        params = jnp.concatenate([scale_p, bias_p, scale_t, bias_t])

    # ---- generation-aware VMEM / tile budget --------------------------------
    try:
        vmem_cap = int(pltpu.get_tpu_info().vmem_capacity_bytes)
    except Exception:
        vmem_cap = 64 * 1024 * 1024          # conservative (v7x-sized) fallback
    vmem_limit = max(32 * 1024 * 1024,
                     min(vmem_cap - 16 * 1024 * 1024, 64 * 1024 * 1024))

    itemsize = p2d.dtype.itemsize
    # Per-element VMEM cost per grid step: 2 tensors x C channel planes, double
    # buffered, plus ~8 live f32 tile-sized temporaries (pc/tc/dot/pn2/tn2/cos)
    # that Mosaic keeps in VMEM for large blocks.
    bytes_per_elem = 2 * C * 2 * itemsize + 8 * 4
    max_elems = (vmem_limit - 8 * 1024 * 1024) // bytes_per_elem
    if max_tile_bytes is not None:
        max_elems = min(max_elems, max_tile_bytes // itemsize)
    max_elems = max(max_elems, 8 * 128)

    # Lane tile: 128-multiple dividing HW_pad; sublane tile: 8-multiple
    # dividing N (or all of N).  Maximize tile size, prefer lane-dense shapes.
    q = HW_pad // 128
    lane_opts = sorted((128 * d for d in range(1, q + 1) if q % d == 0),
                       reverse=True)
    bn_opts = sorted((b for b in range(8, N + 1, 8) if N % b == 0),
                     reverse=True) or [N]
    best = None
    for bn_c in bn_opts:
        for bhw_c in lane_opts:              # descending: first fit = largest
            if bn_c * bhw_c <= max_elems:
                cand = (bn_c * bhw_c, bhw_c, bn_c)
                if best is None or cand > best:
                    best = cand
                break
    if best is None:
        # TODO(synk): huge batch not divisible by 8; smallest legal tile may
        # still exceed the VMEM budget.
        bn, bhw = bn_opts[-1], lane_opts[-1]
    else:
        _, bhw, bn = best
    gn, ghw = N // bn, HW_pad // bhw

    def chan_spec(c):
        # Channel plane c inside the (N, C*HW_pad) slab, tiled (bn, bhw).
        return pl.BlockSpec((bn, bhw), lambda i, j, c=c: (i, c * ghw + j))

    in_specs = [pl.BlockSpec(memory_space=pltpu.MemorySpace.SMEM)]
    in_specs += [chan_spec(c) for c in range(C)]   # pred channel planes
    in_specs += [chan_spec(c) for c in range(C)]   # true channel planes

    partials = pl.pallas_call(
        _make_kernel(C),
        out_shape=jax.ShapeDtypeStruct((gn * 8, ghw * 128), jnp.float32),
        grid_spec=pltpu.PrefetchScalarGridSpec(
            num_scalar_prefetch=0,
            grid=(gn, ghw),
            in_specs=in_specs,
            out_specs=pl.BlockSpec((8, 128), lambda i, j: (i, j)),
        ),
        compiler_params=pltpu.CompilerParams(
            dimension_semantics=("parallel", "parallel"),
            vmem_limit_bytes=vmem_limit,
        ),
    )(params, *([p2d] * C), *([t2d] * C))

    # Each (8,128) slab holds one splatted partial; pick one element per cell.
    cell = partials.reshape(gn, 8, ghw, 128)[:, 0, :, 0]
    return jnp.sum(cell) / float(N * HW)


def _reference(y_pred, y_true, mean=_MEAN, std=_STD):
    """Pure-JAX reference mirroring the PyTorch forward."""
    mean_a = jnp.asarray(mean, jnp.float32).reshape(1, -1, 1, 1)
    std_a = jnp.asarray(std, jnp.float32).reshape(1, -1, 1, 1)

    def maybe_denorm(x):
        oob = jnp.logical_or(jnp.min(x) < 0.0, jnp.max(x) > 1.0)
        return jnp.where(oob, x * std_a + mean_a, x)

    p = maybe_denorm(jnp.asarray(y_pred, jnp.float32))
    t = maybe_denorm(jnp.asarray(y_true, jnp.float32))
    dot = jnp.sum(p * t, axis=1)
    cos = dot / jnp.maximum(
        jnp.sqrt(jnp.sum(p * p, axis=1)) * jnp.sqrt(jnp.sum(t * t, axis=1)), _EPS)
    return jnp.mean(cos)


if __name__ == "__main__":
    key = jax.random.PRNGKey(0)
    mean_b = jnp.asarray(_MEAN, jnp.float32).reshape(1, 3, 1, 1)
    std_b = jnp.asarray(_STD, jnp.float32).reshape(1, 3, 1, 1)

    cases = (
        # (shape, pred normalized (oob), true normalized, dtype, max_tile_bytes)
        ((2, 3, 16, 16), True, False, jnp.float32, None),       # free path, 1 cell
        ((2, 3, 64, 64), True, True, jnp.float32, None),        # free path, big tile
        ((16, 3, 64, 64), False, True, jnp.float32, 64 * 1024), # forced 2x2 grid
        ((2, 3, 10, 10), True, True, jnp.float32, None),        # pad path (HW=100)
        ((4, 3, 24, 24), False, False, jnp.float32, 8 * 1024),  # pad path, 2 lane tiles
        ((2, 3, 32, 32), True, False, jnp.bfloat16, None),      # bf16 through the DMA
    )
    for idx, ((N, C, H, W), pred_norm, true_norm, dtype, mtb) in enumerate(cases):
        k1, k2 = jax.random.split(jax.random.fold_in(key, idx))
        base_p = jax.random.uniform(k1, (N, C, H, W), dtype=jnp.float32)
        base_t = jax.random.uniform(k2, (N, C, H, W), dtype=jnp.float32)
        y_pred = ((base_p - mean_b) / std_b) if pred_norm else base_p
        y_true = ((base_t - mean_b) / std_b) if true_norm else base_t
        y_pred = y_pred.astype(dtype)
        y_true = y_true.astype(dtype)

        out = jax.block_until_ready(
            normalize_cos_similarity(y_pred, y_true, max_tile_bytes=mtb))
        ref = _reference(y_pred, y_true)
        assert jnp.allclose(out, ref, atol=1e-5, rtol=1e-5), (idx, out, ref)

    print("KERNEL_OK")
</pallas_src>

<mosaic_0001>
module attributes {stable_mosaic.version = 11 : i64} {
  func.func @kernel(%arg0: i32, %arg1: i32, %arg2: memref<12xf32, #tpu.memory_space<smem>>, %arg3: memref<2x256xf32, #tpu.memory_space<vmem>>, %arg4: memref<2x256xf32, #tpu.memory_space<vmem>>, %arg5: memref<2x256xf32, #tpu.memory_space<vmem>>, %arg6: memref<2x256xf32, #tpu.memory_space<vmem>>, %arg7: memref<2x256xf32, #tpu.memory_space<vmem>>, %arg8: memref<2x256xf32, #tpu.memory_space<vmem>>, %arg9: memref<8x128xf32, #tpu.memory_space<vmem>>) attributes {dimension_semantics = [#tpu.dimension_semantics<parallel>, #tpu.dimension_semantics<parallel>], iteration_bounds = array<i64: 1, 1>, scalar_prefetch = 0 : i64, scratch_operands = 0 : i64, tpu.core_type = #tpu.core_type<tc>, window_params = [{transform_indices = @transform_0, window_bounds = array<i64: 12>}, {transform_indices = @transform_1, window_bounds = array<i64: 2, 256>}, {transform_indices = @transform_2, window_bounds = array<i64: 2, 256>}, {transform_indices = @transform_3, window_bounds = array<i64: 2, 256>}, {transform_indices = @transform_4, window_bounds = array<i64: 2, 256>}, {transform_indices = @transform_5, window_bounds = array<i64: 2, 256>}, {transform_indices = @transform_6, window_bounds = array<i64: 2, 256>}, {transform_indices = @transform_7, window_bounds = array<i64: 8, 128>}]} {
    %c0 = arith.constant 0 : index
    %c0_0 = arith.constant 0 : index
    %0 = vector.load %arg3[%c0, %c0_0] : memref<2x256xf32, #tpu.memory_space<vmem>>, vector<2x256xf32>
    %c0_1 = arith.constant 0 : index
    %1 = memref.load %arg2[%c0_1] : memref<12xf32, #tpu.memory_space<smem>>
    %2 = vector.broadcast %1 : f32 to vector<2x256xf32>
    %3 = arith.mulf %0, %2 : vector<2x256xf32>
    %c3 = arith.constant 3 : index
    %4 = memref.load %arg2[%c3] : memref<12xf32, #tpu.memory_space<smem>>
    %5 = vector.broadcast %4 : f32 to vector<2x256xf32>
    %6 = arith.addf %3, %5 : vector<2x256xf32>
    %c0_2 = arith.constant 0 : index
    %c0_3 = arith.constant 0 : index
    %7 = vector.load %arg6[%c0_2, %c0_3] : memref<2x256xf32, #tpu.memory_space<vmem>>, vector<2x256xf32>
    %c6 = arith.constant 6 : index
    %8 = memref.load %arg2[%c6] : memref<12xf32, #tpu.memory_space<smem>>
    %9 = vector.broadcast %8 : f32 to vector<2x256xf32>
    %10 = arith.mulf %7, %9 : vector<2x256xf32>
    %c9 = arith.constant 9 : index
    %11 = memref.load %arg2[%c9] : memref<12xf32, #tpu.memory_space<smem>>
    %12 = vector.broadcast %11 : f32 to vector<2x256xf32>
    %13 = arith.addf %10, %12 : vector<2x256xf32>
    %14 = arith.mulf %6, %13 : vector<2x256xf32>
    %15 = arith.mulf %6, %6 : vector<2x256xf32>
    %16 = arith.mulf %13, %13 : vector<2x256xf32>
    %c0_4 = arith.constant 0 : index
    %c0_5 = arith.constant 0 : index
    %17 = vector.load %arg4[%c0_4, %c0_5] : memref<2x256xf32, #tpu.memory_space<vmem>>, vector<2x256xf32>
    %c1 = arith.constant 1 : index
    %18 = memref.load %arg2[%c1] : memref<12xf32, #tpu.memory_space<smem>>
    %19 = vector.broadcast %18 : f32 to vector<2x256xf32>
    %20 = arith.mulf %17, %19 : vector<2x256xf32>
    %c4 = arith.constant 4 : index
    %21 = memref.load %arg2[%c4] : memref<12xf32, #tpu.memory_space<smem>>
    %22 = vector.broadcast %21 : f32 to vector<2x256xf32>
    %23 = arith.addf %20, %22 : vector<2x256xf32>
    %c0_6 = arith.constant 0 : index
    %c0_7 = arith.constant 0 : index
    %24 = vector.load %arg7[%c0_6, %c0_7] : memref<2x256xf32, #tpu.memory_space<vmem>>, vector<2x256xf32>
    %c7 = arith.constant 7 : index
    %25 = memref.load %arg2[%c7] : memref<12xf32, #tpu.memory_space<smem>>
    %26 = vector.broadcast %25 : f32 to vector<2x256xf32>
    %27 = arith.mulf %24, %26 : vector<2x256xf32>
    %c10 = arith.constant 10 : index
    %28 = memref.load %arg2[%c10] : memref<12xf32, #tpu.memory_space<smem>>
    %29 = vector.broadcast %28 : f32 to vector<2x256xf32>
    %30 = arith.addf %27, %29 : vector<2x256xf32>
    %31 = arith.mulf %23, %30 : vector<2x256xf32>
    %32 = arith.mulf %23, %23 : vector<2x256xf32>
    %33 = arith.mulf %30, %30 : vector<2x256xf32>
    %34 = arith.addf %14, %31 : vector<2x256xf32>
    %35 = arith.addf %15, %32 : vector<2x256xf32>
    %36 = arith.addf %16, %33 : vector<2x256xf32>
    %c0_8 = arith.constant 0 : index
    %c0_9 = arith.constant 0 : index
    %37 = vector.load %arg5[%c0_8, %c0_9] : memref<2x256xf32, #tpu.memory_space<vmem>>, vector<2x256xf32>
    %c2 = arith.constant 2 : index
    %38 = memref.load %arg2[%c2] : memref<12xf32, #tpu.memory_space<smem>>
    %39 = vector.broadcast %38 : f32 to vector<2x256xf32>
    %40 = arith.mulf %37, %39 : vector<2x256xf32>
    %c5 = arith.constant 5 : index
    %41 = memref.load %arg2[%c5] : memref<12xf32, #tpu.memory_space<smem>>
    %42 = vector.broadcast %41 : f32 to vector<2x256xf32>
    %43 = arith.addf %40, %42 : vector<2x256xf32>
    %c0_10 = arith.constant 0 : index
    %c0_11 = arith.constant 0 : index
    %44 = vector.load %arg8[%c0_10, %c0_11] : memref<2x256xf32, #tpu.memory_space<vmem>>, vector<2x256xf32>
    %c8 = arith.constant 8 : index
    %45 = memref.load %arg2[%c8] : memref<12xf32, #tpu.memory_space<smem>>
    %46 = vector.broadcast %45 : f32 to vector<2x256xf32>
    %47 = arith.mulf %44, %46 : vector<2x256xf32>
    %c11 = arith.constant 11 : index
    %48 = memref.load %arg2[%c11] : memref<12xf32, #tpu.memory_space<smem>>
    %49 = vector.broadcast %48 : f32 to vector<2x256xf32>
    %50 = arith.addf %47, %49 : vector<2x256xf32>
    %51 = arith.mulf %43, %50 : vector<2x256xf32>
    %52 = arith.mulf %43, %43 : vector<2x256xf32>
    %53 = arith.mulf %50, %50 : vector<2x256xf32>
    %54 = arith.addf %34, %51 : vector<2x256xf32>
    %55 = arith.addf %35, %52 : vector<2x256xf32>
    %56 = arith.addf %36, %53 : vector<2x256xf32>
    %57 = arith.mulf %55, %56 : vector<2x256xf32>
    %cst = arith.constant 1.000000e-16 : f32
    %58 = vector.broadcast %cst : f32 to vector<2x256xf32>
    %59 = arith.maximumf %57, %58 : vector<2x256xf32>
    %60 = math.rsqrt %59 : vector<2x256xf32>
    %61 = arith.mulf %54, %60 : vector<2x256xf32>
    %62 = vector.shape_cast %61 : vector<2x256xf32> to vector<1x2x256xf32>
    %cst_12 = arith.constant dense<0.000000e+00> : vector<1xf32>
    %63 = vector.multi_reduction <add>, %62, %cst_12 [1, 2] : vector<1x2x256xf32> to vector<1xf32>
    %64 = vector.shape_cast %63 : vector<1xf32> to vector<1x1x1xf32>
    %65 = vector.extract %64[0, 0, 0] : f32 from vector<1x1x1xf32>
    %66 = vector.broadcast %65 : f32 to vector<8x128xf32>
    %c0_13 = arith.constant 0 : index
    %c0_14 = arith.constant 0 : index
    %67 = vector.load %arg9[%c0_13, %c0_14] : memref<8x128xf32, #tpu.memory_space<vmem>>, vector<8x128xf32>
    tpu.vector_store %arg9[%c0_13, %c0_14], %66 {strides = array<i32>} : memref<8x128xf32, #tpu.memory_space<vmem>>, vector<8x128xf32>,
    return
  }
  func.func @transform_0(%arg0: i32, %arg1: i32) -> i32 {
    %c0_i32 = arith.constant 0 : i32
    %c0_i32_0 = arith.constant 0 : i32
    return %c0_i32 : i32
  }
  func.func @transform_1(%arg0: i32, %arg1: i32) -> (i32, i32) {
    %c0_i32 = arith.constant 0 : i32
    %0 = arith.addi %c0_i32, %arg1 : i32
    %c0_i32_0 = arith.constant 0 : i32
    return %arg0, %0 : i32, i32
  }
  func.func @transform_2(%arg0: i32, %arg1: i32) -> (i32, i32) {
    %c1_i32 = arith.constant 1 : i32
    %0 = arith.addi %c1_i32, %arg1 : i32
    %c0_i32 = arith.constant 0 : i32
    return %arg0, %0 : i32, i32
  }
  func.func @transform_3(%arg0: i32, %arg1: i32) -> (i32, i32) {
    %c2_i32 = arith.constant 2 : i32
    %0 = arith.addi %c2_i32, %arg1 : i32
    %c0_i32 = arith.constant 0 : i32
    return %arg0, %0 : i32, i32
  }
  func.func @transform_4(%arg0: i32, %arg1: i32) -> (i32, i32) {
    %c0_i32 = arith.constant 0 : i32
    %0 = arith.addi %c0_i32, %arg1 : i32
    %c0_i32_0 = arith.constant 0 : i32
    return %arg0, %0 : i32, i32
  }
  func.func @transform_5(%arg0: i32, %arg1: i32) -> (i32, i32) {
    %c1_i32 = arith.constant 1 : i32
    %0 = arith.addi %c1_i32, %arg1 : i32
    %c0_i32 = arith.constant 0 : i32
    return %arg0, %0 : i32, i32
  }
  func.func @transform_6(%arg0: i32, %arg1: i32) -> (i32, i32) {
    %c2_i32 = arith.constant 2 : i32
    %0 = arith.addi %c2_i32, %arg1 : i32
    %c0_i32 = arith.constant 0 : i32
    return %arg0, %0 : i32, i32
  }
  func.func @transform_7(%arg0: i32, %arg1: i32) -> (i32, i32) {
    %c0_i32 = arith.constant 0 : i32
    return %arg0, %arg1 : i32, i32
  }
}

</mosaic_0001>

<llo_original>
// kernel: normalize_cos_similarity.1
$region0: #{normalize_cos_similarity.1}
  #allocation0 [shape = 'u32[]', space=smem, size = 0x4, offset = 0x4, fixed_abs, tag = 'smem constant byte address 0x4 - core index']
  #allocation1 [shape = 'u32[144,128]{1,0:T(1,128)}', space=vmem, size = 0x12000, scoped, tag = 'internal scratch']
  %s0 = inlined_call_operand.vmem [shape: f32[12], index: 0, kind: input, shape index: {}]
  %s1 = inlined_call_operand.vmem [shape: f32[2,768], index: 1, kind: input, shape index: {}, may-alias: {1,2,3}]
  %s2 = inlined_call_operand.vmem [shape: f32[2,768], index: 2, kind: input, shape index: {}, may-alias: {1,2,3}]
  %s3 = inlined_call_operand.vmem [shape: f32[2,768], index: 3, kind: input, shape index: {}, may-alias: {1,2,3}]
  %s4 = inlined_call_operand.vmem [shape: f32[2,768], index: 4, kind: input, shape index: {}, may-alias: {4,5,6}]
  %s5 = inlined_call_operand.vmem [shape: f32[2,768], index: 5, kind: input, shape index: {}, may-alias: {4,5,6}]
  %s6 = inlined_call_operand.vmem [shape: f32[2,768], index: 6, kind: input, shape index: {}, may-alias: {4,5,6}]
  %s7 = inlined_call_operand.vmem [shape: f32[8,128], index: 7, kind: output, shape index: {}]
  %s8 = sld [smem:[#allocation0]]
  $region42: #{normalize_cos_similarity.1} parent=0
    _
  %s10 = ssub.s32 1, %s8
  %s11 = scalar_select 0, %s10, %s8
  $region1: #{normalize_cos_similarity.1} parent=0
    #allocation2 [shape = 'u8[512]{0}', space=smem, size = 0x200, scoped, tag = 'input window, operand 0, single buffered']
    #allocation3 [shape = 's32[1]{0}', space=sflag, size = 0x4, scoped, tag = 'scoped memory for normalize_cos_similarity.1']
    %12 = vsyncpa [#allocation3], 0
    // Predicated region
    $region2: #{normalize_cos_similarity.1} parent=1 // pred_check
      _
    $region3: #{normalize_cos_similarity.1} parent=1 // pred_check_branch
      %14 = sbr.rel (0) target = $region5
    $region4: #{normalize_cos_similarity.1} parent=1 // pred_region
      %s16 = ssub.s32 16, 16
      %17 = vsyncadd [#allocation3], %s16
      %s19 = sshll.u32 %s0, 4
      %s20 = int_to_ptr.vmem [resolvable:$true] %s19
      %22 = dma.vmem_to_smem %s20, 16, [#allocation2], [#allocation3]
    $region5: #{normalize_cos_similarity.1} parent=1 // pred_fallthru
      _
    // Predicated region
    $region6: #{normalize_cos_similarity.1} parent=1 // pred_check
      _
    $region7: #{normalize_cos_similarity.1} parent=1 // pred_check_branch
      %24 = sbr.rel (0) target = $region9
    $region8: #{normalize_cos_similarity.1} parent=1 // pred_region
      _
    $region9: #{normalize_cos_similarity.1} parent=1 // pred_fallthru
      _
    // Predicated region
    $region10: #{normalize_cos_similarity.1} parent=1 // pred_check
      _
    $region11: #{normalize_cos_similarity.1} parent=1 // pred_check_branch
      %26 = sbr.rel (0) target = $region13
    $region12: #{normalize_cos_similarity.1} parent=1 // pred_region
      %s27 = sadd.s32 0, 1
      %s28 = smul.u32 2, %s27
      %p29 = scmp.lt.s32.totalorder %s28, 5
      %s30 = scalar_select %p29, %s28, 5
      %s31 = smul.addr %s30, 2
      %s32 = scalar_lea.vmem %s2, %s31
      %s33 = sadd.s32 0, 1
      %s34 = smul.u32 2, %s33
    $region13: #{normalize_cos_similarity.1} parent=1 // pred_fallthru
      _
    // Predicated region
    $region14: #{normalize_cos_similarity.1} parent=1 // pred_check
      _
    $region15: #{normalize_cos_similarity.1} parent=1 // pred_check_branch
      %36 = sbr.rel (0) target = $region17
    $region16: #{normalize_cos_similarity.1} parent=1 // pred_region
      %s37 = sadd.s32 0, 2
      %s38 = smul.u32 2, %s37
      %p39 = scmp.lt.s32.totalorder %s38, 5
      %s40 = scalar_select %p39, %s38, 5
      %s41 = smul.addr %s40, 2
      %s42 = scalar_lea.vmem %s3, %s41
      %s43 = sadd.s32 0, 2
      %s44 = smul.u32 2, %s43
    $region17: #{normalize_cos_similarity.1} parent=1 // pred_fallthru
      _
    // Predicated region
    $region18: #{normalize_cos_similarity.1} parent=1 // pred_check
      _
    $region19: #{normalize_cos_similarity.1} parent=1 // pred_check_branch
      %46 = sbr.rel (0) target = $region21
    $region20: #{normalize_cos_similarity.1} parent=1 // pred_region
      _
    $region21: #{normalize_cos_similarity.1} parent=1 // pred_fallthru
      _
    // Predicated region
    $region22: #{normalize_cos_similarity.1} parent=1 // pred_check
      _
    $region23: #{normalize_cos_similarity.1} parent=1 // pred_check_branch
      %48 = sbr.rel (0) target = $region25
    $region24: #{normalize_cos_similarity.1} parent=1 // pred_region
      %s49 = sadd.s32 0, 1
      %s50 = smul.u32 2, %s49
      %p51 = scmp.lt.s32.totalorder %s50, 5
      %s52 = scalar_select %p51, %s50, 5
      %s53 = smul.addr %s52, 2
      %s54 = scalar_lea.vmem %s5, %s53
      %s55 = sadd.s32 0, 1
      %s56 = smul.u32 2, %s55
    $region25: #{normalize_cos_similarity.1} parent=1 // pred_fallthru
      _
    // Predicated region
    $region26: #{normalize_cos_similarity.1} parent=1 // pred_check
      _
    $region27: #{normalize_cos_similarity.1} parent=1 // pred_check_branch
      %58 = sbr.rel (0) target = $region29
    $region28: #{normalize_cos_similarity.1} parent=1 // pred_region
      %s59 = sadd.s32 0, 2
      %s60 = smul.u32 2, %s59
      %p61 = scmp.lt.s32.totalorder %s60, 5
      %s62 = scalar_select %p61, %s60, 5
      %s63 = smul.addr %s62, 2
      %s64 = scalar_lea.vmem %s6, %s63
      %s65 = sadd.s32 0, 2
      %s66 = smul.u32 2, %s65
    $region29: #{normalize_cos_similarity.1} parent=1 // pred_fallthru
      _
    // Predicated region
    $region30: #{normalize_cos_similarity.1} parent=1 // pred_check
      _
    $region31: #{normalize_cos_similarity.1} parent=1 // pred_check_branch
      %68 = sbr.rel (0) target = $region33
    $region32: #{normalize_cos_similarity.1} parent=1 // pred_region
      %69 = dma.done [#allocation3], 16
    $region33: #{normalize_cos_similarity.1} parent=1 // pred_fallthru
      _
    %70 = sfence
    %s71 = sadd.s32 0, 1
    %s72 = smul.u32 2, %s71
    %p73 = scmp.lt.s32.totalorder %s72, 5
    %s74 = scalar_select %p73, %s72, 5
    %s75 = smul.addr %s74, 2
    %s76 = scalar_lea.vmem %s2, %s75
    %s77 = sadd.s32 0, 2
    %s78 = smul.u32 2, %s77
    %p79 = scmp.lt.s32.totalorder %s78, 5
    %s80 = scalar_select %p79, %s78, 5
    %s81 = smul.addr %s80, 2
    %s82 = scalar_lea.vmem %s3, %s81
    %s83 = sadd.s32 0, 1
    %s84 = smul.u32 2, %s83
    %p85 = scmp.lt.s32.totalorder %s84, 5
    %s86 = scalar_select %p85, %s84, 5
    %s87 = smul.addr %s86, 2
    %s88 = scalar_lea.vmem %s5, %s87
    %s89 = sadd.s32 0, 2
    %s90 = smul.u32 2, %s89
    %p91 = scmp.lt.s32.totalorder %s90, 5
    %s92 = scalar_select %p91, %s90, 5
    %s93 = smul.addr %s92, 2
    %s94 = scalar_lea.vmem %s6, %s93
    %s95 = sadd.s32 0, 1
    %s96 = smul.u32 2, %s95
    %p97 = scmp.lt.s32.totalorder %s96, 5
    %s98 = scalar_select %p97, %s96, 5
    %s99 = smul.addr %s98, 2
    %s100 = scalar_lea.vmem %s2, %s99
    %s101 = sadd.s32 0, 1
    %s102 = smul.u32 2, %s101
    %s103 = sadd.s32 0, 2
    %s104 = smul.u32 2, %s103
    %p105 = scmp.lt.s32.totalorder %s104, 5
    %s106 = scalar_select %p105, %s104, 5
    %s107 = smul.addr %s106, 2
    %s108 = scalar_lea.vmem %s3, %s107
    %s109 = sadd.s32 0, 2
    %s110 = smul.u32 2, %s109
    %s111 = sadd.s32 0, 1
    %s112 = smul.u32 2, %s111
    %p113 = scmp.lt.s32.totalorder %s112, 5
    %s114 = scalar_select %p113, %s112, 5
    %s115 = smul.addr %s114, 2
    %s116 = scalar_lea.vmem %s5, %s115
    %s117 = sadd.s32 0, 1
    %s118 = smul.u32 2, %s117
    %s119 = sadd.s32 0, 2
    %s120 = smul.u32 2, %s119
    %p121 = scmp.lt.s32.totalorder %s120, 5
    %s122 = scalar_select %p121, %s120, 5
    %s123 = smul.addr %s122, 2
    %s124 = scalar_lea.vmem %s6, %s123
    %s125 = sadd.s32 0, 2
    %s126 = smul.u32 2, %s125
    %v127 = vld [vmem:[%s1] sm:$0xf]
    %s128 = sld [smem:[#allocation2]]
    %v129 = vstv %s128
    %v130 = vmul.f32 %v127, %v129
    %s131 = sld [smem:[#allocation2 + $0x3]]
    %v132 = vstv %s131
    %v133 = vadd.f32 %v130, %v132
    %v134 = vld [vmem:[%s4] sm:$0xf]
    %s135 = sld [smem:[#allocation2 + $0x6]]
    %v136 = vstv %s135
    %v137 = vmul.f32 %v134, %v136
    %s138 = sld [smem:[#allocation2 + $0x9]]
    %v139 = vstv %s138
    %v140 = vadd.f32 %v137, %v139
    %v141 = vmul.f32 %v133, %v140
    %v142 = vmul.f32 %v133, %v133
    %v143 = vmul.f32 %v140, %v140
    %v144 = vld [vmem:[%s100] sm:$0xf]
    %s145 = sld [smem:[#allocation2 + $0x1]]
    %v146 = vstv %s145
    %v147 = vmul.f32 %v144, %v146
    %s148 = sld [smem:[#allocation2 + $0x4]]
    %v149 = vstv %s148
    %v150 = vadd.f32 %v147, %v149
    %v151 = vld [vmem:[%s116] sm:$0xf]
    %s152 = sld [smem:[#allocation2 + $0x7]]
    %v153 = vstv %s152
    %v154 = vmul.f32 %v151, %v153
    %s155 = sld [smem:[#allocation2 + $0xa]]
    %v156 = vstv %s155
    %v157 = vadd.f32 %v154, %v156
    %v158 = vmul.f32 %v150, %v157
    %v159 = vmul.f32 %v150, %v150
    %v160 = vmul.f32 %v157, %v157
    %v161 = vadd.f32 %v141, %v158
    %v162 = vadd.f32 %v142, %v159
    %v163 = vadd.f32 %v143, %v160
    %v164 = vld [vmem:[%s108] sm:$0xf]
    %s165 = sld [smem:[#allocation2 + $0x2]]
    %v166 = vstv %s165
    %v167 = vmul.f32 %v164, %v166
    %s168 = sld [smem:[#allocation2 + $0x5]]
    %v169 = vstv %s168
    %v170 = vadd.f32 %v167, %v169
    %v171 = vld [vmem:[%s124] sm:$0xf]
    %s172 = sld [smem:[#allocation2 + $0x8]]
    %v173 = vstv %s172
    %v174 = vmul.f32 %v171, %v173
    %s175 = sld [smem:[#allocation2 + $0xb]]
    %v176 = vstv %s175
    %v177 = vadd.f32 %v174, %v176
    %v178 = vmul.f32 %v170, %v177
    %v179 = vmul.f32 %v170, %v170
    %v180 = vmul.f32 %v177, %v177
    %v181 = vadd.f32 %v161, %v178
    %v182 = vadd.f32 %v162, %v179
    %v183 = vadd.f32 %v163, %v180
    %v184 = vmul.f32 %v182, %v183
    %v185 = vmax.f32 %v184, 1e-16
    %v186 = vrsqrt.pop %v185
    %v187 = vmul.f32 %v181, %v186
    %v190 = vunpack.c.l.s4 1983009808
    %v191 = vunpack.c.0.s8 %v190
    %v192 = vlaneseq
    %v193 = vshrl.u32 %v192, 7
    %v194 = vsub.s32 %v191, %v193
    %v195 = vrot.slane %v187, %v194
    %v196 = vcombine.high %v195, %v195
    %vm199 = vcmask 1041408
    %v200 = vsel %vm199, %v195, 0.0
    %v201 = vsel %vm199, %v196, 0.0
    %v202 = vadd.f32 %v200, %v201
    %203 = vadd.xlane.f32.xlu0 %v202
    %v204 = vpop.xlane.xlu0 %203
    %v205 = vrot.slane %v204, 4
    %v206 = vadd.f32 %v204, %v205
    %v207 = vrot.slane %v206, 2
    %v208 = vadd.f32 %v206, %v207
    %v209 = vrot.slane %v208, 1
    %v210 = vadd.f32 %v208, %v209
    %s211 = vtos %v210
    %v212 = vstv %s211
    %213 = vst [vmem:[%s7] sm:$0xff] %v212
    // Predicated region
    $region34: #{normalize_cos_similarity.1} parent=1 // pred_check
      _
    $region35: #{normalize_cos_similarity.1} parent=1 // pred_check_branch
      %215 = sbr.rel (0) target = $region37
    $region36: #{normalize_cos_similarity.1} parent=1 // pred_region
      _
    $region37: #{normalize_cos_similarity.1} parent=1 // pred_fallthru
      _
    // Predicated region
    $region38: #{normalize_cos_similarity.1} parent=1 // pred_check
      _
    $region39: #{normalize_cos_similarity.1} parent=1 // pred_check_branch
      %217 = sbr.rel (0) target = $region41
    $region40: #{normalize_cos_similarity.1} parent=1 // pred_region
      _
    $region41: #{normalize_cos_similarity.1} parent=1 // pred_fallthru
      _
    %218 = vsyncpa [#allocation3], 1

</llo_original>
